<compile_context>
chip_gen: v7x
topology: tpu7x:2x2x1
jax: 0.10.0
libtpu: 0.0.40
codegen_flags: <defaults>
</compile_context>

<pallas_src>
import numpy as np
import jax
import jax.numpy as jnp
from jax.experimental import pallas as pl
from jax.experimental.pallas import tpu as pltpu


# Sublane granularity (rows) per element size, only used to pick a tidy 2-D
# slab; HBM→HBM DMA itself has no (8,128) constraint.
_SUBLANE = {4: 8, 2: 16, 1: 32}

# Up to this many DMA chunks kept in flight; don't bother splitting chunks
# below ~1 MiB (a single DMA already saturates HBM for small arrays).
_MAX_DMA_CHUNKS = 8
_MIN_CHUNK_BYTES = 1 << 20


def _pick_slab(total: int, itemsize: int):
    """Row-major (rows, cols) factorization of `total`; contiguous chunks along
    rows are contiguous in HBM, which is all the DMA engines care about."""
    sublane = _SUBLANE.get(itemsize, 8)
    for cols in (32768, 16384, 8192, 4096, 2048, 1024, 512, 256, 128):
        if total % cols:
            continue
        rows = total // cols
        if rows == 1 or rows % sublane == 0:
            return rows, cols
    return 1, total


def _make_hbm_copy_kernel(chunks):
    """Kernel factory: direct HBM→HBM DMA copy of `chunks` row-ranges.

    chunks: tuple of (start_row, n_rows) static Python ints.
    Kernel signature: (x_hbm_ref, o_hbm_ref, dma_sems).
    """
    def kernel(x_hbm, o_hbm, sems):
        copies = []
        # Start every chunk before waiting on any: several outstanding DMAs
        # keep HBM saturated; the copy never touches VMEM or vregs.
        for k, (start, size) in enumerate(chunks):
            cp = pltpu.make_async_copy(
                x_hbm.at[pl.ds(start, size), :],
                o_hbm.at[pl.ds(start, size), :],
                sems.at[k],
            )
            cp.start()
            copies.append(cp)
        for cp in copies:
            cp.wait()
    return kernel


def agent_module_forward(x: jax.Array,
                         task_queue=(),              # drained tasks: numeric no-ops
                         is_expert: bool = False,
                         expertise_areas=frozenset(),
                         materialize: bool = False) -> jax.Array:
    """JAX/Pallas equivalent of AgentModule.forward (an identity passthrough).

    Default path returns x directly (zero HBM traffic — the correct and
    fastest implementation of an identity).  `materialize=True` returns an
    identical *fresh* buffer produced by a chunked HBM→HBM DMA Pallas kernel;
    the input is NOT donated and stays valid.
    """
    # TODO(synk): task/message/reward queue and agent_state bookkeeping are
    # host-side Python state with no numeric effect; no Pallas equivalent.
    if not materialize:
        return x  # forward() is identity: move zero bytes, launch nothing.

    orig_shape = x.shape
    itemsize = int(np.dtype(x.dtype).itemsize)
    total = int(np.prod(orig_shape)) if len(orig_shape) else 1
    if total == 0:
        return x

    rows, cols = _pick_slab(total, itemsize)
    x2d = x.reshape(rows, cols)

    total_bytes = total * itemsize
    n_chunks = int(max(1, min(_MAX_DMA_CHUNKS, rows,
                              total_bytes // _MIN_CHUNK_BYTES)))
    base, rem = divmod(rows, n_chunks)
    chunks = []
    start = 0
    for k in range(n_chunks):
        size = base + (1 if k < rem else 0)
        chunks.append((start, size))
        start += size

    out = pl.pallas_call(
        _make_hbm_copy_kernel(tuple(chunks)),
        out_shape=jax.ShapeDtypeStruct((rows, cols), x.dtype),
        # Raw HBM refs on both sides: no VMEM staging, no BlockSpec pipeline,
        # no per-grid-step overhead — the copy lives entirely on DMA engines.
        in_specs=[pl.BlockSpec(memory_space=pl.ANY)],
        out_specs=pl.BlockSpec(memory_space=pl.ANY),
        scratch_shapes=[pltpu.SemaphoreType.DMA((n_chunks,))],
        cost_estimate=pl.CostEstimate(
            flops=0,
            transcendentals=0,
            bytes_accessed=2 * total_bytes),
    )(x2d)

    return out.reshape(orig_shape)


if __name__ == "__main__":
    key = jax.random.PRNGKey(0)
    # NCHW input consistent with a conv-style agent network: B=2, C=4, H=16, W=16.
    x = jax.random.normal(key, (2, 4, 16, 16), dtype=jnp.float32)
    x_host = np.asarray(x)

    # Default (elide) path: identity, zero HBM traffic.
    y0 = jax.block_until_ready(agent_module_forward(x))
    assert y0.shape == x_host.shape and y0.dtype == x_host.dtype
    assert np.array_equal(np.asarray(y0), x_host)

    # Materialized path: Pallas HBM→HBM DMA copy into a fresh buffer.
    y1 = jax.block_until_ready(agent_module_forward(x, materialize=True))
    assert y1.shape == x_host.shape and y1.dtype == x_host.dtype
    assert np.array_equal(np.asarray(y1), x_host)

    # Input is not donated/aliased: x remains live and unchanged.
    assert np.array_equal(np.asarray(x), x_host)

    print("KERNEL_OK")
</pallas_src>

<mosaic_0001>
module attributes {stable_mosaic.version = 11 : i64} {
  func.func @kernel(%arg0: memref<1x2048xf32, #tpu.memory_space<any>>, %arg1: memref<1x2048xf32, #tpu.memory_space<any>>, %arg2: memref<1x!tpu.dma_semaphore, #tpu.memory_space<semaphore_mem>>) attributes {dimension_semantics = [], scalar_prefetch = 0 : i64, scratch_operands = 1 : i64, tpu.core_type = #tpu.core_type<tc>} {
    %c0_i32 = arith.constant 0 : i32
    %c0_i32_0 = arith.constant 0 : i32
    %c0_i32_1 = arith.constant 0 : i32
    %0 = tpu.memref_slice %arg0[%c0_i32_0, %c0_i32_1] : memref<1x2048xf32, #tpu.memory_space<any>> -> memref<1x2048xf32, #tpu.memory_space<any>>
    %c0_i32_2 = arith.constant 0 : i32
    %c0_i32_3 = arith.constant 0 : i32
    %1 = tpu.memref_slice %arg1[%c0_i32_2, %c0_i32_3] : memref<1x2048xf32, #tpu.memory_space<any>> -> memref<1x2048xf32, #tpu.memory_space<any>>
    %2 = tpu.memref_slice %arg2[%c0_i32] : memref<1x!tpu.dma_semaphore, #tpu.memory_space<semaphore_mem>> -> memref<1x!tpu.dma_semaphore, #tpu.memory_space<semaphore_mem>>
    %3 = tpu.memref_squeeze %2 : memref<1x!tpu.dma_semaphore, #tpu.memory_space<semaphore_mem>> -> memref<!tpu.dma_semaphore, #tpu.memory_space<semaphore_mem>>
    tpu.enqueue_dma source(%0 : memref<1x2048xf32, #tpu.memory_space<any>>) target(%1 : memref<1x2048xf32, #tpu.memory_space<any>>) target_semaphore(%3 : memref<!tpu.dma_semaphore, #tpu.memory_space<semaphore_mem>>)
    %c0_i32_4 = arith.constant 0 : i32
    %c0_i32_5 = arith.constant 0 : i32
    %c0_i32_6 = arith.constant 0 : i32
    %4 = tpu.memref_slice %arg0[%c0_i32_5, %c0_i32_6] : memref<1x2048xf32, #tpu.memory_space<any>> -> memref<1x2048xf32, #tpu.memory_space<any>>
    %c0_i32_7 = arith.constant 0 : i32
    %c0_i32_8 = arith.constant 0 : i32
    %5 = tpu.memref_slice %arg1[%c0_i32_7, %c0_i32_8] : memref<1x2048xf32, #tpu.memory_space<any>> -> memref<1x2048xf32, #tpu.memory_space<any>>
    %6 = tpu.memref_slice %arg2[%c0_i32_4] : memref<1x!tpu.dma_semaphore, #tpu.memory_space<semaphore_mem>> -> memref<1x!tpu.dma_semaphore, #tpu.memory_space<semaphore_mem>>
    %7 = tpu.memref_squeeze %6 : memref<1x!tpu.dma_semaphore, #tpu.memory_space<semaphore_mem>> -> memref<!tpu.dma_semaphore, #tpu.memory_space<semaphore_mem>>
    tpu.wait_dma2 semaphore(%7 : memref<!tpu.dma_semaphore, #tpu.memory_space<semaphore_mem>>) src(%4 : memref<1x2048xf32, #tpu.memory_space<any>>) dst(%5 : memref<1x2048xf32, #tpu.memory_space<any>>)
    return
  }
}

</mosaic_0001>

<llo_original>
// kernel: tpu_custom_call.1
$region0: #{tpu_custom_call.1}
  #allocation0 [shape = 'u32[]', space=smem, size = 0x4, offset = 0x4, fixed_abs, tag = 'smem constant byte address 0x4 - core index']
  #allocation1 [shape = 'u32[144,128]{1,0:T(1,128)}', space=vmem, size = 0x12000, scoped, tag = 'internal scratch']
  #allocation2 [shape = 's32[1]{0}', space=sflag, size = 0x4, scoped, tag = 'scratch operand']
  #allocation3 [shape = 's32[]', space=sflag, size = 0x4, offset = 0, fixed_abs, tag = 'sflag constant byte address 0x0 - dummy sync flag']
  #allocation4 [shape = 'u32[0]{0}', space=smem, size = 0, offset = 0, fixed_abs, tag = 'smem constant byte address 0x0 - null']
  %s0 = inlined_call_operand.hbm [shape: f32[1,2048], index: 0, kind: input, shape index: {}]
  %s1 = inlined_call_operand.hbm [shape: f32[1,2048], index: 1, kind: output, shape index: {}]
  %s2 = sld [smem:[#allocation0]]
  $region2: #{tpu_custom_call.1} parent=0
    _
  %s4 = ssub.s32 1, %s2
  %s5 = scalar_select 0, %s4, %s2
  %s7 = sshll.u32 1, 14
  %s8 = sxor.u32 4294967295, %s7
  %s11 = sshll.u32 3, 24
  %s12 = sxor.u32 4294967295, %s11
  %s13 = sand.u32 0, %s12
  %s15 = sor.u32 %s13, 0
  %18 = dma.general %s0, 256, %s1, [#allocation2], [#allocation3], [#allocation4], %s15, 0
  %s19 = smul.u32 1, 16
  %s20 = sshll.u32 %s19, 4
  %21 = dma.done [#allocation2], %s20
  %22 = vsyncmov [#allocation2]
  %s23 = vpop.sfrf %22
  %p24 = scmp.eq.s32.totalorder %s23, 0
  %p25 = pneg %p24
  %27 = shalt.err (%p25)

</llo_original>
